<compile_context>
chip_gen: v7x
topology: tpu7x:2x2x1
jax: 0.10.0
libtpu: 0.0.40
codegen_flags: <defaults>
</compile_context>

<pallas_src>
import jax
import jax.numpy as jnp
from jax import lax
from jax.experimental import pallas as pl
from jax.experimental.pallas import tpu as pltpu

ALPHA = 0.25
GAMMA = 2.0          # == 2 -> squared explicitly in the kernels
EPS = 1e-6


# ---------------------------------------------------------------------------
# Kernels
# ---------------------------------------------------------------------------

def _make_semantic_kernel(hw_valid, tile, n, c, ragged):
    """pred block (N, C, TILE) logits, target block (N, TILE) int32 labels."""

    def kernel(pred_ref, tgt_ref, out_ref):
        p = pred_ref[...].astype(jnp.float32)               # (N, C, T)
        t = tgt_ref[...]                                     # (N, T) int32

        # softmax prob of the target class, never materializing the softmax.
        m = jnp.max(p, axis=1, keepdims=True)                # (N, 1, T)
        e = jnp.exp(p - m)                                   # (N, C, T)  EUP-dominant
        s = jnp.sum(e, axis=1)                               # (N, T)
        cls = lax.broadcasted_iota(jnp.int32, (n, c, tile), 1)
        e_t = jnp.sum(jnp.where(cls == t[:, None, :], e, 0.0), axis=1)   # (N, T)

        # approx reciprocal (1 EUP vrcp) + one Newton step on the VPU.
        r = pl.reciprocal(s, approx=True)
        r = r * (2.0 - s * r)
        tp = jnp.clip(e_t * r, EPS, 1.0 - EPS)               # (N, T)

        one_m_tp = 1.0 - tp
        # gamma == 2.0 -> explicit square (VPU) instead of pow (EUP)
        l1 = ALPHA * (one_m_tp * one_m_tp) * (-jnp.log(tp))          # target == 1
        l0 = (1.0 - ALPHA) * (tp * tp) * (-jnp.log(one_m_tp))        # target != 1

        # Collapsed form of the faithful PyTorch (N,1,HW) x (1,N,HW) broadcast:
        #   sum_j loss[i,j,hw] = n1[hw]*l1[i,hw] + (N - n1[hw])*l0[i,hw]
        n1 = jnp.sum((t == 1).astype(jnp.float32), axis=0, keepdims=True)   # (1, T)
        contrib = n1 * l1 + (float(n) - n1) * l0              # (N, T)

        def write(val):
            out_ref[...] = jnp.broadcast_to(val, out_ref.shape).astype(jnp.float32)

        if ragged:
            h = pl.program_id(0)
            last = pl.num_programs(0) - 1

            @pl.when(h == last)
            def _():
                # Only the last tile can contain padded / undefined lanes.
                # Must stay a select: garbage lanes may hold Inf/NaN.
                lane = lax.broadcasted_iota(jnp.int32, (n, tile), 1)
                valid = (h * tile + lane) < hw_valid
                write(jnp.sum(jnp.where(valid, contrib, 0.0)))

            @pl.when(h != last)
            def _():
                write(jnp.sum(contrib))
        else:
            write(jnp.sum(contrib))

    return kernel


def _make_instance_kernel(hw_valid, tile, n, ragged):
    """pred block (N, TILE) logits, target block (N, TILE) f32 {0,1} masks."""

    def kernel(pred_ref, tgt_ref, out_ref):
        p = pred_ref[...].astype(jnp.float32)                # (N, T)
        t = tgt_ref[...].astype(jnp.float32)                 # (N, T)

        # sigmoid via 1 exp + 1 approx vrcp (+ Newton step on VPU)
        d = 1.0 + jnp.exp(-p)
        r = pl.reciprocal(d, approx=True)
        r = r * (2.0 - d * r)
        tp = jnp.clip(r, EPS, 1.0 - EPS)

        is1 = t == 1.0
        pt = jnp.where(is1, tp, 1.0 - tp)
        one_m_pt = 1.0 - pt
        alpha_w = jnp.where(is1, ALPHA, 1.0 - ALPHA)
        loss = (one_m_pt * one_m_pt) * alpha_w * (-jnp.log(pt))      # (N, T)

        def write(val):
            out_ref[...] = jnp.broadcast_to(val, out_ref.shape).astype(jnp.float32)

        if ragged:
            h = pl.program_id(0)
            last = pl.num_programs(0) - 1

            @pl.when(h == last)
            def _():
                lane = lax.broadcasted_iota(jnp.int32, (n, tile), 1)
                valid = (h * tile + lane) < hw_valid
                write(jnp.sum(jnp.where(valid, loss, 0.0)))

            @pl.when(h != last)
            def _():
                write(jnp.sum(loss))
        else:
            write(jnp.sum(loss))

    return kernel


# ---------------------------------------------------------------------------
# Wrapper
# ---------------------------------------------------------------------------

def _round_up(x, m):
    return (x + m - 1) // m * m


def _cdiv(a, b):
    return (a + b - 1) // b


def _vmem_capacity_bytes():
    """Per-core VMEM capacity; conservative default if the query fails."""
    try:
        info = pltpu.get_tpu_info()
        for name in ("vmem_capacity_bytes", "vmem_size_bytes", "vmem_bytes"):
            cap = getattr(info, name, None)
            if cap:
                return int(cap)
    except Exception:
        pass
    return 64 * 1024 * 1024   # v7x-safe fallback


def focal_loss(pred, target, *, vmem_budget_bytes=None, max_tile_hw=None,
               vmem_limit_bytes=None):
    """Pallas implementation of FocalLoss(alpha=0.25, gamma=2.0).forward."""
    # ---- generation-aware VMEM budgets -----------------------------------
    vmem_cap = _vmem_capacity_bytes()
    if vmem_cap >= 100 * 1024 * 1024:       # v5e / v6e: 128 MiB physical VMEM
        _budget, _limit, _max_tile = 32 * 1024 * 1024, 80 * 1024 * 1024, 32768
    else:                                    # v7x (64 MiB / TC) or unknown
        _budget, _limit, _max_tile = 16 * 1024 * 1024, 48 * 1024 * 1024, 16384
    vmem_budget_bytes = _budget if vmem_budget_bytes is None else vmem_budget_bytes
    vmem_limit_bytes = _limit if vmem_limit_bytes is None else vmem_limit_bytes
    max_tile_hw = _max_tile if max_tile_hw is None else max_tile_hw

    # ---- shape handling ----------------------------------------------------
    if pred.ndim == 4:
        N, C, H, W = pred.shape
        HW = H * W
        pdt = pred.dtype if jnp.issubdtype(pred.dtype, jnp.floating) else jnp.float32
        p2 = pred.reshape(N, C, HW).astype(pdt)          # keep bf16 as bf16 for DMA
        t2 = target.reshape(N, HW).astype(jnp.int32)
        isz = jnp.dtype(pdt).itemsize
        Cp = _round_up(C, 8)                             # sublane padding of class axis
        Np = _round_up(N, 8)                             # sublane padding of (N,T) temps
        # double-buffered input blocks + f32 upcast/exp/iota/select temporaries
        lane_bytes = (2 * (N * Cp * isz + N * 4)
                      + 4 * N * Cp * 4
                      + 10 * Np * 4)
        denom = float(N) * float(N) * float(HW)
        semantic = True
    elif pred.ndim == 3:
        N, H, W = pred.shape
        HW = H * W
        pdt = pred.dtype if jnp.issubdtype(pred.dtype, jnp.floating) else jnp.float32
        p2 = pred.reshape(N, HW).astype(pdt)
        t2 = target.reshape(N, HW).astype(jnp.float32)
        isz = jnp.dtype(pdt).itemsize
        Np = _round_up(N, 8)
        lane_bytes = 2 * (N * isz + N * 4) + 12 * Np * 4
        denom = float(N) * float(HW)
        semantic = False
    else:
        raise ValueError(f"unsupported pred rank {pred.ndim}")

    # ---- tile selection ----------------------------------------------------
    tile = (vmem_budget_bytes // max(lane_bytes, 1)) // 128 * 128
    tile = max(128, min(tile, max_tile_hw))
    # keep >= ~8 grid steps when HW allows it (pipelining + v7x megacore)
    tile = min(tile, max(128, _round_up(_cdiv(HW, 8), 128)))
    tile = min(tile, _round_up(HW, 128))      # never larger than needed
    num_tiles = _cdiv(HW, tile)
    ragged = (HW % tile) != 0                 # trailing block partial (no jnp.pad)

    if semantic:
        kernel = _make_semantic_kernel(HW, tile, N, C, ragged)
        in_specs = [
            pl.BlockSpec((N, C, tile), lambda h: (0, 0, h)),
            pl.BlockSpec((N, tile), lambda h: (0, h)),
        ]
    else:
        kernel = _make_instance_kernel(HW, tile, N, ragged)
        in_specs = [
            pl.BlockSpec((N, tile), lambda h: (0, h)),
            pl.BlockSpec((N, tile), lambda h: (0, h)),
        ]

    partials = pl.pallas_call(
        kernel,
        out_shape=jax.ShapeDtypeStruct((num_tiles, 8, 128), jnp.float32),
        grid=(num_tiles,),
        in_specs=in_specs,
        out_specs=pl.BlockSpec((1, 8, 128), lambda h: (h, 0, 0)),
        compiler_params=pltpu.CompilerParams(
            dimension_semantics=("parallel",),
            vmem_limit_bytes=vmem_limit_bytes,
        ),
    )(p2, t2)

    # tiny wrapper-side combine of per-tile partial sums, then the mean divide
    return jnp.sum(partials[:, 0, 0]) / denom


# ---------------------------------------------------------------------------
# Pure-JAX reference (mirrors the PyTorch code, including its broadcast)
# ---------------------------------------------------------------------------

def focal_loss_ref(pred, target, alpha=ALPHA, gamma=GAMMA):
    eps = 1e-6
    if pred.ndim == 4:
        p = jax.nn.softmax(pred.astype(jnp.float32), axis=1)
        tp = jnp.take_along_axis(p, target[:, None, :, :].astype(jnp.int32), axis=1)
    else:
        p = jax.nn.sigmoid(pred.astype(jnp.float32))
        tp = p
        target = target.astype(jnp.float32)
    tp = jnp.clip(tp, eps, 1.0 - eps)
    pt = jnp.where(target == 1, tp, 1.0 - tp)
    fw = (1.0 - pt) ** gamma
    aw = jnp.where(target == 1, alpha, 1.0 - alpha)
    bce = -jnp.log(jnp.where(target == 1, tp, 1.0 - tp))
    return jnp.mean(fw * aw * bce)


if __name__ == "__main__":
    key = jax.random.PRNGKey(0)
    k1, k2, k3, k4, k5, k6 = jax.random.split(key, 6)

    # Semantic segmentation mode: pred (N, C, H, W), target (N, H, W) int
    N, C, H, W = 2, 4, 16, 16
    pred_sem = jax.random.normal(k1, (N, C, H, W), dtype=jnp.float32)
    tgt_sem = jax.random.randint(k2, (N, H, W), 0, C, dtype=jnp.int32)

    loss_sem = jax.block_until_ready(focal_loss(pred_sem, tgt_sem))
    ref_sem = jax.block_until_ready(focal_loss_ref(pred_sem, tgt_sem))
    assert jnp.allclose(loss_sem, ref_sem, rtol=1e-3, atol=1e-5), (loss_sem, ref_sem)

    # Instance segmentation mode: pred (N, H, W), target (N, H, W) binary
    pred_ins = jax.random.normal(k3, (N, H, W), dtype=jnp.float32)
    tgt_ins = jax.random.randint(k4, (N, H, W), 0, 2, dtype=jnp.int32).astype(jnp.float32)

    loss_ins = jax.block_until_ready(focal_loss(pred_ins, tgt_ins))
    ref_ins = jax.block_until_ready(focal_loss_ref(pred_ins, tgt_ins))
    assert jnp.allclose(loss_ins, ref_ins, rtol=1e-3, atol=1e-5), (loss_ins, ref_ins)

    # Odd spatial size (exercises the ragged trailing-block mask path), semantic
    N2, C2, H2, W2 = 2, 3, 10, 12
    pred_odd = jax.random.normal(k5, (N2, C2, H2, W2), dtype=jnp.float32)
    tgt_odd = jax.random.randint(k6, (N2, H2, W2), 0, C2, dtype=jnp.int32)

    loss_odd = jax.block_until_ready(focal_loss(pred_odd, tgt_odd))
    ref_odd = jax.block_until_ready(focal_loss_ref(pred_odd, tgt_odd))
    assert jnp.allclose(loss_odd, ref_odd, rtol=1e-3, atol=1e-5), (loss_odd, ref_odd)

    print("KERNEL_OK")
</pallas_src>

<mosaic_0001>
module attributes {stable_mosaic.version = 11 : i64} {
  func.func @kernel(%arg0: i32, %arg1: memref<2x4x128xf32, #tpu.memory_space<vmem>>, %arg2: memref<2x128xi32, #tpu.memory_space<vmem>>, %arg3: memref<1x8x128xf32, #tpu.memory_space<vmem>>) attributes {dimension_semantics = [#tpu.dimension_semantics<parallel>], iteration_bounds = array<i64: 2>, scalar_prefetch = 0 : i64, scratch_operands = 0 : i64, tpu.core_type = #tpu.core_type<tc>, window_params = [{transform_indices = @transform_0, window_bounds = array<i64: 2, 4, 128>}, {transform_indices = @transform_1, window_bounds = array<i64: 2, 128>}, {transform_indices = @transform_2, window_bounds = array<i64: 1, 8, 128>}]} {
    %c0 = arith.constant 0 : index
    %c0_0 = arith.constant 0 : index
    %c0_1 = arith.constant 0 : index
    %0 = vector.load %arg1[%c0, %c0_0, %c0_1] : memref<2x4x128xf32, #tpu.memory_space<vmem>>, vector<2x4x128xf32>
    %c0_2 = arith.constant 0 : index
    %c0_3 = arith.constant 0 : index
    %1 = vector.load %arg2[%c0_2, %c0_3] : memref<2x128xi32, #tpu.memory_space<vmem>>, vector<2x128xi32>
    %cst = arith.constant dense<0xFF800000> : vector<2x128xf32>
    %2 = vector.multi_reduction <maximumf>, %0, %cst [1] : vector<2x4x128xf32> to vector<2x128xf32>
    %3 = vector.shape_cast %2 : vector<2x128xf32> to vector<2x1x128xf32>
    %4 = vector.broadcast %3 : vector<2x1x128xf32> to vector<2x4x128xf32>
    %5 = arith.subf %0, %4 : vector<2x4x128xf32>
    %6 = math.exp %5 : vector<2x4x128xf32>
    %cst_4 = arith.constant dense<0.000000e+00> : vector<2x128xf32>
    %7 = vector.multi_reduction <add>, %6, %cst_4 [1] : vector<2x4x128xf32> to vector<2x128xf32>
    %8 = tpu.iota {dimensions = array<i32: 1>} : vector<2x4x128xi32>
    %9 = vector.shape_cast %1 : vector<2x128xi32> to vector<2x1x128xi32>
    %10 = vector.broadcast %9 : vector<2x1x128xi32> to vector<2x4x128xi32>
    %11 = arith.cmpi eq, %8, %10 : vector<2x4x128xi32>
    %cst_5 = arith.constant 0.000000e+00 : f32
    %12 = vector.broadcast %cst_5 : f32 to vector<2x4x128xf32>
    %13 = arith.select %11, %6, %12 : vector<2x4x128xi1>, vector<2x4x128xf32>
    %cst_6 = arith.constant dense<0.000000e+00> : vector<2x128xf32>
    %14 = vector.multi_reduction <add>, %13, %cst_6 [1] : vector<2x4x128xf32> to vector<2x128xf32>
    %15 = tpu.reciprocal %7 {approx = true} : vector<2x128xf32> -> vector<2x128xf32>
    %16 = arith.mulf %7, %15 : vector<2x128xf32>
    %cst_7 = arith.constant 2.000000e+00 : f32
    %17 = vector.broadcast %cst_7 : f32 to vector<2x128xf32>
    %18 = arith.subf %17, %16 : vector<2x128xf32>
    %19 = arith.mulf %15, %18 : vector<2x128xf32>
    %20 = arith.mulf %14, %19 : vector<2x128xf32>
    %cst_8 = arith.constant 9.99999997E-7 : f32
    %cst_9 = arith.constant 0.999998986 : f32
    %21 = vector.broadcast %cst_8 : f32 to vector<2x128xf32>
    %22 = arith.maximumf %21, %20 : vector<2x128xf32>
    %23 = vector.broadcast %cst_9 : f32 to vector<2x128xf32>
    %24 = arith.minimumf %23, %22 : vector<2x128xf32>
    %cst_10 = arith.constant 1.000000e+00 : f32
    %25 = vector.broadcast %cst_10 : f32 to vector<2x128xf32>
    %26 = arith.subf %25, %24 : vector<2x128xf32>
    %27 = arith.mulf %26, %26 : vector<2x128xf32>
    %cst_11 = arith.constant 2.500000e-01 : f32
    %28 = vector.broadcast %cst_11 : f32 to vector<2x128xf32>
    %29 = arith.mulf %28, %27 : vector<2x128xf32>
    %30 = math.log %24 : vector<2x128xf32>
    %cst_12 = arith.constant 0.000000e+00 : f32
    %31 = vector.broadcast %cst_12 : f32 to vector<2x128xf32>
    %32 = arith.subf %31, %30 : vector<2x128xf32>
    %33 = arith.mulf %29, %32 : vector<2x128xf32>
    %34 = arith.mulf %24, %24 : vector<2x128xf32>
    %cst_13 = arith.constant 7.500000e-01 : f32
    %35 = vector.broadcast %cst_13 : f32 to vector<2x128xf32>
    %36 = arith.mulf %35, %34 : vector<2x128xf32>
    %37 = math.log %26 : vector<2x128xf32>
    %cst_14 = arith.constant 0.000000e+00 : f32
    %38 = vector.broadcast %cst_14 : f32 to vector<2x128xf32>
    %39 = arith.subf %38, %37 : vector<2x128xf32>
    %40 = arith.mulf %36, %39 : vector<2x128xf32>
    %c1_i32 = arith.constant 1 : i32
    %41 = vector.broadcast %c1_i32 : i32 to vector<2x128xi32>
    %42 = arith.cmpi eq, %1, %41 : vector<2x128xi32>
    %43 = arith.extui %42 : vector<2x128xi1> to vector<2x128xi32>
    %44 = arith.sitofp %43 : vector<2x128xi32> to vector<2x128xf32>
    %cst_15 = arith.constant dense<0.000000e+00> : vector<128xf32>
    %45 = vector.multi_reduction <add>, %44, %cst_15 [0] : vector<2x128xf32> to vector<128xf32>
    %46 = vector.shape_cast %45 : vector<128xf32> to vector<1x128xf32>
    %47 = vector.broadcast %46 : vector<1x128xf32> to vector<2x128xf32>
    %48 = arith.mulf %47, %33 : vector<2x128xf32>
    %cst_16 = arith.constant 2.000000e+00 : f32
    %49 = vector.broadcast %cst_16 : f32 to vector<1x128xf32>
    %50 = arith.subf %49, %46 : vector<1x128xf32>
    %51 = vector.broadcast %50 : vector<1x128xf32> to vector<2x128xf32>
    %52 = arith.mulf %51, %40 : vector<2x128xf32>
    %53 = arith.addf %48, %52 : vector<2x128xf32>
    %54 = vector.shape_cast %53 : vector<2x128xf32> to vector<1x2x128xf32>
    %cst_17 = arith.constant dense<0.000000e+00> : vector<1xf32>
    %55 = vector.multi_reduction <add>, %54, %cst_17 [1, 2] : vector<1x2x128xf32> to vector<1xf32>
    %56 = vector.shape_cast %55 : vector<1xf32> to vector<1x1x1xf32>
    %57 = vector.extract %56[0, 0, 0] : f32 from vector<1x1x1xf32>
    %58 = vector.broadcast %57 : f32 to vector<1x8x128xf32>
    %c0_18 = arith.constant 0 : index
    %c0_19 = arith.constant 0 : index
    %c0_20 = arith.constant 0 : index
    %59 = vector.load %arg3[%c0_18, %c0_19, %c0_20] : memref<1x8x128xf32, #tpu.memory_space<vmem>>, vector<1x8x128xf32>
    tpu.vector_store %arg3[%c0_18, %c0_19, %c0_20], %58 {strides = array<i32>} : memref<1x8x128xf32, #tpu.memory_space<vmem>>, vector<1x8x128xf32>,
    return
  }
  func.func @transform_0(%arg0: i32) -> (i32, i32, i32) {
    %c0_i32 = arith.constant 0 : i32
    %c0_i32_0 = arith.constant 0 : i32
    %c0_i32_1 = arith.constant 0 : i32
    return %c0_i32, %c0_i32_0, %arg0 : i32, i32, i32
  }
  func.func @transform_1(%arg0: i32) -> (i32, i32) {
    %c0_i32 = arith.constant 0 : i32
    %c0_i32_0 = arith.constant 0 : i32
    return %c0_i32, %arg0 : i32, i32
  }
  func.func @transform_2(%arg0: i32) -> (i32, i32, i32) {
    %c0_i32 = arith.constant 0 : i32
    %c0_i32_0 = arith.constant 0 : i32
    %c0_i32_1 = arith.constant 0 : i32
    return %arg0, %c0_i32, %c0_i32_0 : i32, i32, i32
  }
}

</mosaic_0001>

<llo_original>
// kernel: tpu_custom_call.1
$region0: #{tpu_custom_call.1}
  #allocation0 [shape = 'u32[]', space=smem, size = 0x4, offset = 0x4, fixed_abs, tag = 'smem constant byte address 0x4 - core index']
  #allocation1 [shape = 'u32[144,128]{1,0:T(1,128)}', space=vmem, size = 0x12000, scoped, tag = 'internal scratch']
  %s0 = inlined_call_operand.hbm [shape: f32[2,4,256], index: 0, kind: input, shape index: {}]
  %s1 = inlined_call_operand.hbm [shape: s32[2,256], index: 1, kind: input, shape index: {}]
  %s2 = inlined_call_operand.hbm [shape: f32[2,8,128], index: 2, kind: output, shape index: {}]
  %s3 = sld [smem:[#allocation0]]
  $region49: #{tpu_custom_call.1} parent=0
    _
  %s5 = ssub.s32 1, %s3
  %s6 = scalar_select 0, %s5, %s3
  $region1: #{tpu_custom_call.1} parent=0
    #allocation2 [shape = 'u8[8192]{0}', space=vmem, size = 0x2000, scoped, tag = 'input window, operand 0']
    #allocation3 [shape = 's32[2]{0}', space=sflag, size = 0x8, scoped, tag = 'scoped memory for tpu_custom_call.1']
    #allocation4 [shape = 's32[2]{0}', space=sflag, size = 0x8, scoped, tag = 'scoped memory for tpu_custom_call.1']
    #allocation5 [shape = 'u8[2048]{0}', space=vmem, size = 0x800, scoped, tag = 'input window, operand 1']
    #allocation6 [shape = 's32[2]{0}', space=sflag, size = 0x8, scoped, tag = 'scoped memory for tpu_custom_call.1']
    #allocation7 [shape = 'u8[8192]{0}', space=vmem, size = 0x2000, scoped, tag = 'output window, operand 0']
    %7 = vsyncpa [#allocation3], 0
    %s8 = scalar_lea.sflag [#allocation3], 1
    %9 = vsyncpa %s8, 0
    %10 = vsyncpa [#allocation6], 0
    %s11 = scalar_lea.sflag [#allocation6], 1
    %12 = vsyncpa %s11, 0
    %13 = vsyncpa [#allocation4], 0
    %s14 = scalar_lea.sflag [#allocation4], 1
    %15 = vsyncpa %s14, 0
    loop: start=0, step=1, limit=4
    $region2: #{tpu_custom_call.1} parent=1 // loop_pre_header
      _
    $region3: #{tpu_custom_call.1} parent=1 // loop_header
      %s17 = sphi 0, %s21
      %p18 = scmp.ge.s32.totalorder %s17, 4
      %s27 = sphi 0, %s29
      %s30 = sphi 0, %s27
      %s31 = sphi 0, %s30
      %s47 = sphi 0, %s31
      %s53 = sphi 0, %s55
      %s56 = sphi 0, %s53
      %s57 = sphi 0, %s56
      %s73 = sphi 0, %s57
      %s79 = sphi 0, %s81
      %s82 = sphi 0, %s79
      %s83 = sphi 0, %s82
      %s99 = sphi 0, %s83
    $region4: #{tpu_custom_call.1} parent=1 // loop_header_branch
      %20 = sbr.rel (%p18) target = $region8
    $region5: #{tpu_custom_call.1} parent=1 // loop_body
      %s22 = ssub.s32 %s17, 1
      %s23 = ssub.s32 %s17, 2
      %s24 = sadd.s32 %s17, 1
      %s25 = ssub.s32 %s17, %s24
      %p26 = scmp.eq.s32.totalorder %s25, 0
      %s28 = sadd.s32 %s27, 1
      %s29 = scalar_select %p26, %s27, %s28
      %p32 = pneg %p26
      %p33 = scmp.eq.s32.totalorder %s17, 1
      %p34 = por %p32, %p33
      %p35 = scmp.ne.s32.totalorder %s27, %s30
      %p36 = scmp.eq.s32.totalorder %s17, 0
      %p37 = por %p35, %p36
      %p38 = scmp.ne.s32.totalorder %s27, %s30
      %p39 = scmp.eq.s32.totalorder %s22, 1
      %p40 = por %p38, %p39
      %p41 = scmp.ne.s32.totalorder %s30, %s31
      %p42 = scmp.eq.s32.totalorder %s22, 0
      %p43 = por %p41, %p42
      %p44 = scmp.ne.s32.totalorder %s30, %s31
      %p45 = scmp.eq.s32.totalorder %s23, 1
      %p46 = por %p44, %p45
      %p48 = scmp.ne.s32.totalorder %s31, %s47
      %p49 = scmp.eq.s32.totalorder %s23, 0
      %p50 = por %p48, %p49
      %s51 = ssub.s32 %s17, %s24
      %p52 = scmp.eq.s32.totalorder %s51, 0
      %s54 = sadd.s32 %s53, 1
      %s55 = scalar_select %p52, %s53, %s54
      %p58 = pneg %p52
      %p59 = scmp.eq.s32.totalorder %s17, 1
      %p60 = por %p58, %p59
      %p61 = scmp.ne.s32.totalorder %s53, %s56
      %p62 = scmp.eq.s32.totalorder %s17, 0
      %p63 = por %p61, %p62
      %p64 = scmp.ne.s32.totalorder %s53, %s56
      %p65 = scmp.eq.s32.totalorder %s22, 1
      %p66 = por %p64, %p65
      %p67 = scmp.ne.s32.totalorder %s56, %s57
      %p68 = scmp.eq.s32.totalorder %s22, 0
      %p69 = por %p67, %p68
      %p70 = scmp.ne.s32.totalorder %s56, %s57
      %p71 = scmp.eq.s32.totalorder %s23, 1
      %p72 = por %p70, %p71
      %p74 = scmp.ne.s32.totalorder %s57, %s73
      %p75 = scmp.eq.s32.totalorder %s23, 0
      %p76 = por %p74, %p75
      %s77 = ssub.s32 %s17, %s24
      %p78 = scmp.eq.s32.totalorder %s77, 0
      %s80 = sadd.s32 %s79, 1
      %s81 = scalar_select %p78, %s79, %s80
      %p84 = pneg %p78
      %p85 = scmp.eq.s32.totalorder %s17, 1
      %p86 = por %p84, %p85
      %p87 = scmp.ne.s32.totalorder %s79, %s82
      %p88 = scmp.eq.s32.totalorder %s17, 0
      %p89 = por %p87, %p88
      %p90 = scmp.ne.s32.totalorder %s79, %s82
      %p91 = scmp.eq.s32.totalorder %s22, 1
      %p92 = por %p90, %p91
      %p93 = scmp.ne.s32.totalorder %s82, %s83
      %p94 = scmp.eq.s32.totalorder %s22, 0
      %p95 = por %p93, %p94
      %p96 = scmp.ne.s32.totalorder %s82, %s83
      %p97 = scmp.eq.s32.totalorder %s23, 1
      %p98 = por %p96, %p97
      %p100 = scmp.ne.s32.totalorder %s83, %s99
      %p101 = scmp.eq.s32.totalorder %s23, 0
      %p102 = por %p100, %p101
      %p103 = scmp.le.s32.totalorder 1, %s17
      %p104 = scmp.lt.s32.totalorder %s17, 3
      %p105 = pnand %p103, %p104
      %p106 = pneg %p105
      // Predicated region
      $region9: #{tpu_custom_call.1} parent=5 // pred_check
        _
      $region10: #{tpu_custom_call.1} parent=5 // pred_check_branch
        %108 = sbr.rel (%p105) target = $region12
      $region11: #{tpu_custom_call.1} parent=5 // pred_region
        %s109 = ssub.s32 %s17, 1
      $region12: #{tpu_custom_call.1} parent=5 // pred_fallthru
        _
      %p110 = scmp.lt.s32.totalorder %s17, 2
      // Predicated region
      $region13: #{tpu_custom_call.1} parent=5 // pred_check
        %p111 = pneg %p110
      $region14: #{tpu_custom_call.1} parent=5 // pred_check_branch
        %113 = sbr.rel (%p111) target = $region16
      $region15: #{tpu_custom_call.1} parent=5 // pred_region
        // Predicated region
        $region17: #{tpu_custom_call.1} parent=15 // pred_check
          %p114 = pneg %p37
        $region18: #{tpu_custom_call.1} parent=15 // pred_check_branch
          %116 = sbr.rel (%p114) target = $region20
        $region19: #{tpu_custom_call.1} parent=15 // pred_region
          %s117 = sand.u32 %s27, 1
          %s118 = scalar_lea.sflag [#allocation3], %s117
          %s119 = sand.u32 %s27, 1
          %s120 = smul.addr %s119, 8
          %s121 = scalar_lea.vmem [#allocation2], %s120
          %s123 = ssub.s32 128, 128
          %124 = vsyncadd %s118, %s123
          %s125 = smul.addr %s17, 64
          %s126 = scalar_lea.hbm %s0, %s125
          %s127 = sshll.u32 %s121, 4
          %s128 = int_to_ptr.vmem [resolvable:$true] %s127
          %133 = dma.hbm_to_vmem [thread:$0]  %s126, 128, %s128, %s118, 128, 64, 4
        $region20: #{tpu_custom_call.1} parent=15 // pred_fallthru
          _
        // Predicated region
        $region21: #{tpu_custom_call.1} parent=15 // pred_check
          %p134 = pneg %p63
        $region22: #{tpu_custom_call.1} parent=15 // pred_check_branch
          %136 = sbr.rel (%p134) target = $region24
        $region23: #{tpu_custom_call.1} parent=15 // pred_region
          %s137 = sand.u32 %s53, 1
          %s138 = scalar_lea.sflag [#allocation6], %s137
          %s139 = sand.u32 %s53, 1
          %s140 = smul.addr %s139, 2
          %s141 = scalar_lea.vmem [#allocation5], %s140
          %s143 = ssub.s32 32, 32
          %144 = vsyncadd %s138, %s143
          %s145 = smul.addr %s17, 32
          %s146 = scalar_lea.hbm %s1, %s145
          %s148 = sshll.u32 %s141, 4
          %s149 = int_to_ptr.vmem [resolvable:$true] %s148
          %151 = dma.hbm_to_vmem [thread:$0]  %s146, 32, %s149, %s138
        $region24: #{tpu_custom_call.1} parent=15 // pred_fallthru
          _
      $region16: #{tpu_custom_call.1} parent=5 // pred_fallthru
        _
      %p152 = scmp.le.s32.totalorder 1, %s17
      %p153 = scmp.lt.s32.totalorder %s17, 3
      %p154 = pnand %p152, %p153
      %p155 = pneg %p154
      // Predicated region
      $region25: #{tpu_custom_call.1} parent=5 // pred_check
        _
      $region26: #{tpu_custom_call.1} parent=5 // pred_check_branch
        %157 = sbr.rel (%p154) target = $region28
      $region27: #{tpu_custom_call.1} parent=5 // pred_region
        %s158 = ssub.s32 %s17, 1
        %s159 = sand.u32 %s30, 1
        %s160 = scalar_lea.sflag [#allocation3], %s159
        %s161 = sand.u32 %s30, 1
        %s162 = smul.addr %s161, 8
        %s163 = scalar_lea.vmem [#allocation2], %s162
        // Predicated region
        $region29: #{tpu_custom_call.1} parent=27 // pred_check
          %p164 = pneg %p43
        $region30: #{tpu_custom_call.1} parent=27 // pred_check_branch
          %166 = sbr.rel (%p164) target = $region32
        $region31: #{tpu_custom_call.1} parent=27 // pred_region
          %167 = dma.done %s160, 128
        $region32: #{tpu_custom_call.1} parent=27 // pred_fallthru
          _
        %s168 = sand.u32 %s56, 1
        %s169 = scalar_lea.sflag [#allocation6], %s168
        %s170 = sand.u32 %s56, 1
        %s171 = smul.addr %s170, 2
        %s172 = scalar_lea.vmem [#allocation5], %s171
        // Predicated region
        $region33: #{tpu_custom_call.1} parent=27 // pred_check
          %p173 = pneg %p69
        $region34: #{tpu_custom_call.1} parent=27 // pred_check_branch
          %175 = sbr.rel (%p173) target = $region36
        $region35: #{tpu_custom_call.1} parent=27 // pred_region
          %176 = dma.done %s169, 32
        $region36: #{tpu_custom_call.1} parent=27 // pred_fallthru
          _
        %s177 = sand.u32 %s30, 1
        %s178 = scalar_lea.sflag [#allocation3], %s177
        %s179 = sand.u32 %s30, 1
        %s180 = smul.addr %s179, 8
        %s181 = scalar_lea.vmem [#allocation2], %s180
        %p182 = pneg %p43
        %p183 = pneg %p40
        %s184 = sand.u32 %s56, 1
        %s185 = scalar_lea.sflag [#allocation6], %s184
        %s186 = sand.u32 %s56, 1
        %s187 = smul.addr %s186, 2
        %s188 = scalar_lea.vmem [#allocation5], %s187
        %p189 = pneg %p69
        %p190 = pneg %p66
        %p191 = pneg %p95
        %p192 = pneg %p92
        %s193 = sand.u32 %s82, 1
        %s194 = scalar_lea.sflag [#allocation4], %s193
        %s195 = sand.u32 %s82, 1
        %s196 = smul.addr %s195, 8
        %s197 = scalar_lea.vmem [#allocation7], %s196
        %v198 = vld [vmem:[%s163] sm:$0xf]
        %v199 = vld [vmem:[%s163 + $0x4] sm:$0xf]
        %v200 = vld [vmem:[%s172] sm:$0x3]
        %vm201 = vcmask 1043456
        %v202 = vsel %vm201, %v198, -inf
        %v203 = vrot.slane %v202, 4
        %v204 = vmax.f32 %v202, %v203
        %v205 = vrot.slane %v204, 2
        %v206 = vmax.f32 %v204, %v205
        %v207 = vrot.slane %v206, 1
        %v208 = vmax.f32 %v206, %v207
        %v209 = vsel %vm201, %v199, -inf
        %v210 = vrot.slane %v209, 4
        %v211 = vmax.f32 %v209, %v210
        %v212 = vrot.slane %v211, 2
        %v213 = vmax.f32 %v211, %v212
        %v214 = vrot.slane %v213, 1
        %v215 = vmax.f32 %v213, %v214
        %v216 = vsub.f32 %v198, %v208
        %v217 = vsub.f32 %v199, %v215
        %v218 = vmul.f32 %v216, 1.442695
        %v219 = vpow.pop %v218
        %v220 = vmul.f32 %v217, 1.442695
        %v221 = vpow.pop %v220
        %v222 = vsel %vm201, %v219, 0.0
        %v223 = vrot.slane %v222, 4
        %v224 = vadd.f32 %v222, %v223
        %v225 = vrot.slane %v224, 2
        %v226 = vadd.f32 %v224, %v225
        %v227 = vrot.slane %v226, 1
        %v228 = vadd.f32 %v226, %v227
        %v229 = vsel %vm201, %v221, 0.0
        %v230 = vrot.slane %v229, 4
        %v231 = vadd.f32 %v229, %v230
        %v232 = vrot.slane %v231, 2
        %v233 = vadd.f32 %v231, %v232
        %v234 = vrot.slane %v233, 1
        %v235 = vadd.f32 %v233, %v234
        %v236 = vlaneseq
        %v237 = vshrl.u32 %v236, 7
        %v239 = vunpack.c.l.s4 1966171168
        %v240 = vunpack.c.0.s8 %v239
        %v241 = vlaneseq
        %v242 = vshrl.u32 %v241, 7
        %v243 = vsub.s32 %v240, %v242
        %v244 = vrot.slane %v200, %v243
        %v245 = vcombine.high %v244, %v244
        %v247 = vunpack.c.l.s4 1966171168
        %v248 = vunpack.c.0.s8 %v247
        %v249 = vlaneseq
        %v250 = vshrl.u32 %v249, 7
        %v251 = vsub.s32 %v248, %v250
        %v252 = vrot.slane %v244, %v251
        %v254 = vunpack.c.l.s4 1966171168
        %v255 = vunpack.c.0.s8 %v254
        %v256 = vlaneseq
        %v257 = vshrl.u32 %v256, 7
        %v258 = vsub.s32 %v255, %v257
        %v259 = vrot.slane %v245, %v258
        %v260 = vlaneseq
        %v261 = vshrl.u32 %v260, 7
        %v262 = vsub.s32 0, %v261
        %v263 = vrot.slane %v252, %v262
        %v264 = vlaneseq
        %v265 = vshrl.u32 %v264, 7
        %v266 = vsub.s32 0, %v265
        %v267 = vrot.slane %v259, %v266
        %vm268 = vcmp.eq.s32.totalorder %v237, %v263
        %vm269 = vcmp.eq.s32.totalorder %v237, %v267
        %v270 = vsel %vm268, %v219, 0.0
        %v271 = vsel %vm269, %v221, 0.0
        %v272 = vsel %vm201, %v270, 0.0
        %v273 = vrot.slane %v272, 4
        %v274 = vadd.f32 %v272, %v273
        %v275 = vrot.slane %v274, 2
        %v276 = vadd.f32 %v274, %v275
        %v277 = vrot.slane %v276, 1
        %v278 = vadd.f32 %v276, %v277
        %v279 = vsel %vm201, %v271, 0.0
        %v280 = vrot.slane %v279, 4
        %v281 = vadd.f32 %v279, %v280
        %v282 = vrot.slane %v281, 2
        %v283 = vadd.f32 %v281, %v282
        %v284 = vrot.slane %v283, 1
        %v285 = vadd.f32 %v283, %v284
        %v286 = vrcp.pop %v228
        %v287 = vrcp.pop %v235
        %v288 = vmul.f32 %v228, %v286
        %v289 = vmul.f32 %v235, %v287
        %v290 = vsub.f32 2.0, %v288
        %v291 = vsub.f32 2.0, %v289
        %v292 = vmul.f32 %v286, %v290
        %v293 = vmul.f32 %v287, %v291
        %v294 = vmul.f32 %v278, %v292
        %v295 = vmul.f32 %v285, %v293
        %v296 = vmax.f32 %v294, 1e-06
        %v297 = vmax.f32 %v295, 1e-06
        %v298 = vmin.f32 %v296, 0.999999
        %v299 = vmin.f32 %v297, 0.999999
        %v300 = vsub.f32 1.0, %v298
        %v301 = vsub.f32 1.0, %v299
        %v302 = vmul.f32 %v300, %v300
        %v303 = vmul.f32 %v301, %v301
        %v304 = vmul.f32 %v302, 0.25
        %v305 = vmul.f32 %v303, 0.25
        %v306 = vlog2.pop %v298
        %v307 = vmul.f32 %v306, 0.6931472
        %v308 = vlog2.pop %v299
        %v309 = vmul.f32 %v308, 0.6931472
        %v310 = vsub.f32 0.0, %v307
        %v311 = vsub.f32 0.0, %v309
        %v312 = vmul.f32 %v304, %v310
        %v313 = vmul.f32 %v305, %v311
        %v314 = vmul.f32 %v298, %v298
        %v315 = vmul.f32 %v299, %v299
        %v316 = vmul.f32 %v314, 0.75
        %v317 = vmul.f32 %v315, 0.75
        %v318 = vlog2.pop %v300
        %v319 = vmul.f32 %v318, 0.6931472
        %v320 = vlog2.pop %v301
        %v321 = vmul.f32 %v320, 0.6931472
        %v322 = vsub.f32 0.0, %v319
        %v323 = vsub.f32 0.0, %v321
        %v324 = vmul.f32 %v316, %v322
        %v325 = vmul.f32 %v317, %v323
        %vm326 = vcmp.eq.s32.totalorder %v200, 1
        %v327 = vsel %vm326, 1, 0
        %v328 = vcvt.s32.f32 %v327
        %vm329 = vcmask 1041408
        %v330 = vsel %vm329, %v328, 0.0
        %v331 = vrot.slane %v330, 4
        %v332 = vadd.f32 %v330, %v331
        %v333 = vrot.slane %v332, 2
        %v334 = vadd.f32 %v332, %v333
        %v335 = vrot.slane %v334, 1
        %v336 = vadd.f32 %v334, %v335
        %vm339 = vcmask 1041409
        %v340 = vsel %vm339, %v313, %v312
        %v342 = vmul.f32 %v336, %v340
        %v343 = vsub.f32 2.0, %v336
        %v346 = vsel %vm339, %v325, %v324
        %v348 = vmul.f32 %v343, %v346
        %v349 = vadd.f32 %v342, %v348
        %v350 = vsel %vm329, %v349, 0.0
        %351 = vadd.xlane.f32.xlu0 %v350
        %v352 = vpop.xlane.xlu0 %351
        %v353 = vrot.slane %v352, 4
        %v354 = vadd.f32 %v352, %v353
        %v355 = vrot.slane %v354, 2
        %v356 = vadd.f32 %v354, %v355
        %v357 = vrot.slane %v356, 1
        %v358 = vadd.f32 %v356, %v357
        %s359 = vtos %v358
        %v360 = vstv %s359
        %361 = vst [vmem:[%s197] sm:$0xff] %v360
        %s362 = sand.u32 %s82, 1
        %s363 = scalar_lea.sflag [#allocation4], %s362
        %s364 = sand.u32 %s82, 1
        %s365 = smul.addr %s364, 8
        %s366 = scalar_lea.vmem [#allocation7], %s365
        // Predicated region
        $region37: #{tpu_custom_call.1} parent=27 // pred_check
          %p367 = pneg %p92
        $region38: #{tpu_custom_call.1} parent=27 // pred_check_branch
          %369 = sbr.rel (%p367) target = $region40
        $region39: #{tpu_custom_call.1} parent=27 // pred_region
          %s371 = ssub.s32 128, 128
          %372 = vsyncadd %s363, %s371
          %s373 = smul.addr %s22, 128
          %s374 = scalar_lea.hbm %s2, %s373
          %s376 = sshll.u32 %s366, 4
          %s377 = int_to_ptr.vmem [resolvable:$true] %s376
          %379 = dma.vmem_to_hbm [thread:$0]  %s377, 128, %s374, %s363
        $region40: #{tpu_custom_call.1} parent=27 // pred_fallthru
          _
      $region28: #{tpu_custom_call.1} parent=5 // pred_fallthru
        _
      %p380 = scmp.le.s32.totalorder 2, %s17
      // Predicated region
      $region41: #{tpu_custom_call.1} parent=5 // pred_check
        %p381 = pneg %p380
      $region42: #{tpu_custom_call.1} parent=5 // pred_check_branch
        %383 = sbr.rel (%p381) target = $region44
      $region43: #{tpu_custom_call.1} parent=5 // pred_region
        %s384 = ssub.s32 %s17, 2
        // Predicated region
        $region45: #{tpu_custom_call.1} parent=43 // pred_check
          %p385 = pneg %p98
        $region46: #{tpu_custom_call.1} parent=43 // pred_check_branch
          %387 = sbr.rel (%p385) target = $region48
        $region47: #{tpu_custom_call.1} parent=43 // pred_region
          %s388 = sand.u32 %s83, 1
          %s389 = scalar_lea.sflag [#allocation4], %s388
          %s390 = sand.u32 %s83, 1
          %s391 = smul.addr %s390, 8
          %s392 = scalar_lea.vmem [#allocation7], %s391
          %393 = dma.done %s389, 128
        $region48: #{tpu_custom_call.1} parent=43 // pred_fallthru
          _
      $region44: #{tpu_custom_call.1} parent=5 // pred_fallthru
        _
    $region6: #{tpu_custom_call.1} parent=1 // loop_footer
      %s21 = sadd.s32 1, %s17
    $region7: #{tpu_custom_call.1} parent=1 // loop_footer_branch
      %16 = sbr.rel target = $region3
    $region8: #{tpu_custom_call.1} parent=1 // loop_exit
      _
    %394 = vsyncpa [#allocation3], 1
    %s395 = scalar_lea.sflag [#allocation3], 1
    %396 = vsyncpa %s395, 1
    %397 = vsyncpa [#allocation6], 1
    %s398 = scalar_lea.sflag [#allocation6], 1
    %399 = vsyncpa %s398, 1
    %400 = vsyncpa [#allocation4], 1
    %s401 = scalar_lea.sflag [#allocation4], 1
    %402 = vsyncpa %s401, 1

</llo_original>
